<compile_context>
chip_gen: v5e
topology: v5e:2x2
jax: 0.10.0
libtpu: 0.0.40
codegen_flags: <defaults>
</compile_context>

<pallas_src>
from functools import partial

import jax
import jax.numpy as jnp
from jax import lax
from jax.experimental import pallas as pl
from jax.experimental.pallas import tpu as pltpu
from jax.scipy.linalg import block_diag


def residual_block_kernel(x_ref, w1_ref, w2_ref, b1_ref, b2_ref,
                          out_ref, pad_ref, *, B, H, LWC):
    """One block of B lane-packed images per grid step.

    x_ref   : (B, H, LWC)        lane-packed image rows (LWC = LP*W*C)
    w{1,2}  : (3*LWC, LWC)       K-stacked, block-diag banded conv weights
                                 (BN scale already folded in)
    b{1,2}  : (1, LWC)           BN shift tiled along the lane dim
    out_ref : (B, H, LWC)
    pad_ref : VMEM (B*(H+2), LWC)  M-stacked padded row buffer (both convs)
    """
    Hp = H + 2
    M = B * Hp
    zero_row = jnp.zeros((1, LWC), jnp.float32)

    # --- fill padded row buffer with the input block (full-lane-width stores,
    #     only the 2 halo rows per image are zeroed) ---
    for b in range(B):                                   # static, unrolled
        base = b * Hp
        pad_ref[base:base + 1, :] = zero_row
        pad_ref[base + 1:base + 1 + H, :] = x_ref[b].astype(jnp.float32)
        pad_ref[base + H + 1:base + H + 2, :] = zero_row

    def banded_conv(w_ref):
        # Fuse the 3 dy bands along K: lhs = 3 row-shifted views of pad_ref
        # concatenated along lanes; rhs = K-stacked banded weight slab.
        lhs = jnp.concatenate(
            [pad_ref[0:M - 2, :], pad_ref[1:M - 1, :], pad_ref[2:M, :]],
            axis=-1)                                     # (M-2, 3*LWC)
        return jnp.dot(lhs, w_ref[...],
                       preferred_element_type=jnp.float32)   # (M-2, LWC)

    # ---- conv1 (BN1 scale folded) + BN1 shift + ReLU ----
    out1 = jnp.maximum(banded_conv(w1_ref) + b1_ref[...], 0.0)

    # ---- refill interior rows with out1 (halo rows are still zero) ----
    for b in range(B):
        base = b * Hp
        pad_ref[base + 1:base + 1 + H, :] = out1[base:base + H, :]

    # ---- conv2 (BN2 scale folded) + BN2 shift + residual + ReLU ----
    y2 = banded_conv(w2_ref) + b2_ref[...]
    for b in range(B):
        base = b * Hp
        res = x_ref[b].astype(jnp.float32)
        out_ref[b] = jnp.maximum(y2[base:base + H, :] + res,
                                 0.0).astype(out_ref.dtype)


def _build_banded_weights(w_hwio, W, C):
    """(3,3,C,C) HWIO -> (3, W*C, W*C) banded matrices over UNPADDED rows.

    band[dy][xin*C + i, xout*C + o] = w_hwio[dy, dx, i, o] with xin = xout+dx-1
    (out-of-range dx dropped == SAME zero padding horizontally), so that
        out_row[y] = sum_dy  input_row[y + dy - 1] @ band[dy]
    with zero rows supplying the vertical halo.
    """
    bands = []
    for dy in range(3):
        acc = jnp.zeros((W * C, W * C), jnp.float32)
        for dx in range(3):
            shift = dx - 1                              # xin = xout + shift
            if shift == 0:
                sel = jnp.eye(W, dtype=jnp.float32)
            elif shift < 0:
                sel = jnp.zeros((W, W), jnp.float32).at[0:W - 1, 1:W].set(
                    jnp.eye(W - 1, dtype=jnp.float32))
            else:
                sel = jnp.zeros((W, W), jnp.float32).at[1:W, 0:W - 1].set(
                    jnp.eye(W - 1, dtype=jnp.float32))
            acc = acc + jnp.einsum("px,io->pixo", sel,
                                   w_hwio[dy, dx]).reshape(W * C, W * C)
        bands.append(acc)
    return jnp.stack(bands, axis=0)                     # (3, WC, WC)


def _pack_fuse_weights(wb, LP):
    """(3, WC, WC) -> (3*LP*WC, LP*WC): block-diag over LP lane-packed images,
    then stack the 3 dy bands along K (matching the kernel's lhs lane-concat)."""
    blocks = [block_diag(*([wb[dy]] * LP)) for dy in range(3)]
    return jnp.concatenate(blocks, axis=0)


def residual_block_pallas(x_nhwc, w1_hwio, w2_hwio, s1, b1, s2, b2):
    N, H, W, C = x_nhwc.shape
    WC = W * C

    # Lane packing: put LP images side-by-side along lanes so the minor dim is
    # (a multiple of) 128 where possible -> lane-dense loads/stores.
    LP = 1
    if WC < 128:
        cand = max(1, 128 // WC)
        while cand > 1 and N % cand != 0:
            cand -= 1
        LP = cand
    NP = N // LP
    LWC = LP * WC

    # Banded conv weights with BN scale folded into output channels and the
    # horizontal halo folded in (bands act on unpadded rows).
    w1b = _build_banded_weights(w1_hwio * s1.reshape(1, 1, 1, C), W, C)
    w2b = _build_banded_weights(w2_hwio * s2.reshape(1, 1, 1, C), W, C)
    w1f = _pack_fuse_weights(w1b, LP)                   # (3*LWC, LWC)
    w2f = _pack_fuse_weights(w2b, LP)
    b1t = jnp.tile(b1.reshape(1, C), (1, W * LP)).astype(jnp.float32)  # (1,LWC)
    b2t = jnp.tile(b2.reshape(1, C), (1, W * LP)).astype(jnp.float32)

    # Lane-packed, lane-dense activation layout: (NP, H, LP*W*C).
    xp = (x_nhwc.reshape(NP, LP, H, W, C)
          .transpose(0, 2, 1, 3, 4)
          .reshape(NP, H, LWC))

    # Stack B packed images into the matmul M dimension per grid step so the
    # MXU M dim is filled and per-step pipeline overhead is amortized.
    max_rows = 256
    B = 1
    for cand in range(NP, 0, -1):
        if NP % cand == 0 and cand * (H + 2) <= max(max_rows, H + 2):
            B = cand
            break
    steps = NP // B

    out_p = pl.pallas_call(
        partial(residual_block_kernel, B=B, H=H, LWC=LWC),
        out_shape=jax.ShapeDtypeStruct((NP, H, LWC), x_nhwc.dtype),
        grid_spec=pltpu.PrefetchScalarGridSpec(
            num_scalar_prefetch=0,
            grid=(steps,),
            in_specs=[
                pl.BlockSpec((B, H, LWC),     lambda n: (n, 0, 0)),
                pl.BlockSpec((3 * LWC, LWC),  lambda n: (0, 0)),
                pl.BlockSpec((3 * LWC, LWC),  lambda n: (0, 0)),
                pl.BlockSpec((1, LWC),        lambda n: (0, 0)),
                pl.BlockSpec((1, LWC),        lambda n: (0, 0)),
            ],
            out_specs=pl.BlockSpec((B, H, LWC), lambda n: (n, 0, 0)),
            scratch_shapes=[pltpu.VMEM((B * (H + 2), LWC), jnp.float32)],
        ),
        compiler_params=pltpu.CompilerParams(
            dimension_semantics=("parallel",)),
    )(xp, w1f, w2f, b1t, b2t)

    return (out_p.reshape(NP, H, LP, W, C)
            .transpose(0, 2, 1, 3, 4)
            .reshape(N, H, W, C))


def _reference_nhwc(x, w1, w2, s1, b1, s2, b2):
    dn = ("NHWC", "HWIO", "NHWC")
    out = lax.conv_general_dilated(x, w1, (1, 1), "SAME", dimension_numbers=dn)
    out = jnp.maximum(out * s1 + b1, 0.0)
    out = lax.conv_general_dilated(out, w2, (1, 1), "SAME", dimension_numbers=dn)
    out = out * s2 + b2
    return jnp.maximum(out + x, 0.0)


if __name__ == "__main__":
    N, C, H, W = 2, 4, 16, 16
    eps = 1e-5

    key = jax.random.PRNGKey(0)
    keys = jax.random.split(key, 11)

    # Input in PyTorch NCHW convention, then moved to NHWC for the kernel.
    x_nchw = jax.random.normal(keys[0], (N, C, H, W), dtype=jnp.float32)
    x_nhwc = jnp.transpose(x_nchw, (0, 2, 3, 1))

    # Conv weights: PyTorch OIHW -> HWIO.
    w1_oihw = 0.1 * jax.random.normal(keys[1], (C, C, 3, 3), dtype=jnp.float32)
    w2_oihw = 0.1 * jax.random.normal(keys[2], (C, C, 3, 3), dtype=jnp.float32)
    w1_hwio = jnp.transpose(w1_oihw, (2, 3, 1, 0))
    w2_hwio = jnp.transpose(w2_oihw, (2, 3, 1, 0))

    # BatchNorm params + running stats (inference mode), folded to scale/shift.
    g1 = 1.0 + 0.1 * jax.random.normal(keys[3], (C,), dtype=jnp.float32)
    be1 = 0.1 * jax.random.normal(keys[4], (C,), dtype=jnp.float32)
    m1 = 0.1 * jax.random.normal(keys[5], (C,), dtype=jnp.float32)
    v1 = jax.random.uniform(keys[6], (C,), minval=0.5, maxval=1.5)
    g2 = 1.0 + 0.1 * jax.random.normal(keys[7], (C,), dtype=jnp.float32)
    be2 = 0.1 * jax.random.normal(keys[8], (C,), dtype=jnp.float32)
    m2 = 0.1 * jax.random.normal(keys[9], (C,), dtype=jnp.float32)
    v2 = jax.random.uniform(keys[10], (C,), minval=0.5, maxval=1.5)

    s1 = g1 / jnp.sqrt(v1 + eps)
    b1 = be1 - m1 * s1
    s2 = g2 / jnp.sqrt(v2 + eps)
    b2 = be2 - m2 * s2

    out_nhwc = residual_block_pallas(x_nhwc, w1_hwio, w2_hwio, s1, b1, s2, b2)
    out_nhwc = jax.block_until_ready(out_nhwc)

    # Self-check against a pure-JAX reference (same NHWC math).
    ref = _reference_nhwc(x_nhwc, w1_hwio, w2_hwio, s1, b1, s2, b2)
    assert jnp.allclose(out_nhwc, ref, rtol=1e-4, atol=1e-4), "mismatch vs reference"

    # Output in PyTorch NCHW convention if needed downstream.
    out_nchw = jnp.transpose(out_nhwc, (0, 3, 1, 2))
    jax.block_until_ready(out_nchw)

    print("KERNEL_OK")
</pallas_src>

<mosaic_0001>
module attributes {stable_mosaic.version = 11 : i64} {
  func.func @residual_block_kernel(%arg0: i32, %arg1: memref<1x16x128xf32, #tpu.memory_space<vmem>>, %arg2: memref<384x128xf32, #tpu.memory_space<vmem>>, %arg3: memref<384x128xf32, #tpu.memory_space<vmem>>, %arg4: memref<1x128xf32, #tpu.memory_space<vmem>>, %arg5: memref<1x128xf32, #tpu.memory_space<vmem>>, %arg6: memref<1x16x128xf32, #tpu.memory_space<vmem>>, %arg7: memref<18x128xf32, #tpu.memory_space<vmem>>) attributes {dimension_semantics = [#tpu.dimension_semantics<parallel>], iteration_bounds = array<i64: 1>, scalar_prefetch = 0 : i64, scratch_operands = 1 : i64, tpu.core_type = #tpu.core_type<tc>, window_params = [{transform_indices = @transform_0, window_bounds = array<i64: 1, 16, 128>}, {pipeline_mode = #tpu.pipeline_mode<synchronous>, transform_indices = @transform_1, window_bounds = array<i64: 384, 128>}, {pipeline_mode = #tpu.pipeline_mode<synchronous>, transform_indices = @transform_2, window_bounds = array<i64: 384, 128>}, {pipeline_mode = #tpu.pipeline_mode<synchronous>, transform_indices = @transform_3, window_bounds = array<i64: 1, 128>}, {pipeline_mode = #tpu.pipeline_mode<synchronous>, transform_indices = @transform_4, window_bounds = array<i64: 1, 128>}, {transform_indices = @transform_5, window_bounds = array<i64: 1, 16, 128>}]} {
    %cst = arith.constant 0.000000e+00 : f32
    %0 = vector.broadcast %cst : f32 to vector<1x128xf32>
    %c0 = arith.constant 0 : index
    %c0_0 = arith.constant 0 : index
    %1 = vector.load %arg7[%c0, %c0_0] : memref<18x128xf32, #tpu.memory_space<vmem>>, vector<1x128xf32>
    tpu.vector_store %arg7[%c0, %c0_0], %0 {strides = array<i32>} : memref<18x128xf32, #tpu.memory_space<vmem>>, vector<1x128xf32>,
    %c0_1 = arith.constant 0 : index
    %c0_2 = arith.constant 0 : index
    %c0_3 = arith.constant 0 : index
    %2 = vector.load %arg1[%c0_1, %c0_2, %c0_3] : memref<1x16x128xf32, #tpu.memory_space<vmem>>, vector<1x16x128xf32>
    %3 = vector.shape_cast %2 : vector<1x16x128xf32> to vector<16x128xf32>
    %c1 = arith.constant 1 : index
    %c0_4 = arith.constant 0 : index
    %4 = vector.load %arg7[%c1, %c0_4] : memref<18x128xf32, #tpu.memory_space<vmem>>, vector<16x128xf32>
    tpu.vector_store %arg7[%c1, %c0_4], %3 {strides = array<i32>} : memref<18x128xf32, #tpu.memory_space<vmem>>, vector<16x128xf32>,
    %c17 = arith.constant 17 : index
    %c0_5 = arith.constant 0 : index
    %5 = vector.load %arg7[%c17, %c0_5] : memref<18x128xf32, #tpu.memory_space<vmem>>, vector<1x128xf32>
    tpu.vector_store %arg7[%c17, %c0_5], %0 {strides = array<i32>} : memref<18x128xf32, #tpu.memory_space<vmem>>, vector<1x128xf32>,
    %c0_6 = arith.constant 0 : index
    %c0_7 = arith.constant 0 : index
    %6 = vector.load %arg7[%c0_6, %c0_7] : memref<18x128xf32, #tpu.memory_space<vmem>>, vector<16x128xf32>
    %c1_8 = arith.constant 1 : index
    %c0_9 = arith.constant 0 : index
    %7 = vector.load %arg7[%c1_8, %c0_9] : memref<18x128xf32, #tpu.memory_space<vmem>>, vector<16x128xf32>
    %c2 = arith.constant 2 : index
    %c0_10 = arith.constant 0 : index
    %8 = vector.load %arg7[%c2, %c0_10] : memref<18x128xf32, #tpu.memory_space<vmem>>, vector<16x128xf32>
    %9 = tpu.concatenate %6, %7, %8 in 1 : vector<16x128xf32>, vector<16x128xf32>, vector<16x128xf32> -> vector<16x384xf32>
    %c0_11 = arith.constant 0 : index
    %c0_12 = arith.constant 0 : index
    %10 = vector.load %arg2[%c0_11, %c0_12] : memref<384x128xf32, #tpu.memory_space<vmem>>, vector<384x128xf32>
    %cst_13 = arith.constant dense<0.000000e+00> : vector<16x128xf32>
    %11 = tpu.matmul %9, %10, %cst_13 {dimension_numbers = #tpu.dot_dimension_numbers<[1], [0], [0], [1], [0, 0, 1, 1], [], []>} : vector<16x384xf32>, vector<384x128xf32>, vector<16x128xf32> -> vector<16x128xf32>
    %c0_14 = arith.constant 0 : index
    %c0_15 = arith.constant 0 : index
    %12 = vector.load %arg4[%c0_14, %c0_15] : memref<1x128xf32, #tpu.memory_space<vmem>>, vector<1x128xf32>
    %13 = vector.broadcast %12 : vector<1x128xf32> to vector<16x128xf32>
    %14 = arith.addf %11, %13 : vector<16x128xf32>
    %cst_16 = arith.constant 0.000000e+00 : f32
    %15 = vector.broadcast %cst_16 : f32 to vector<16x128xf32>
    %16 = arith.maximumf %14, %15 : vector<16x128xf32>
    %c1_17 = arith.constant 1 : index
    %c0_18 = arith.constant 0 : index
    %17 = vector.load %arg7[%c1_17, %c0_18] : memref<18x128xf32, #tpu.memory_space<vmem>>, vector<16x128xf32>
    tpu.vector_store %arg7[%c1_17, %c0_18], %16 {strides = array<i32>} : memref<18x128xf32, #tpu.memory_space<vmem>>, vector<16x128xf32>,
    %c0_19 = arith.constant 0 : index
    %c0_20 = arith.constant 0 : index
    %18 = vector.load %arg7[%c0_19, %c0_20] : memref<18x128xf32, #tpu.memory_space<vmem>>, vector<16x128xf32>
    %c1_21 = arith.constant 1 : index
    %c0_22 = arith.constant 0 : index
    %19 = vector.load %arg7[%c1_21, %c0_22] : memref<18x128xf32, #tpu.memory_space<vmem>>, vector<16x128xf32>
    %c2_23 = arith.constant 2 : index
    %c0_24 = arith.constant 0 : index
    %20 = vector.load %arg7[%c2_23, %c0_24] : memref<18x128xf32, #tpu.memory_space<vmem>>, vector<16x128xf32>
    %21 = tpu.concatenate %18, %19, %20 in 1 : vector<16x128xf32>, vector<16x128xf32>, vector<16x128xf32> -> vector<16x384xf32>
    %c0_25 = arith.constant 0 : index
    %c0_26 = arith.constant 0 : index
    %22 = vector.load %arg3[%c0_25, %c0_26] : memref<384x128xf32, #tpu.memory_space<vmem>>, vector<384x128xf32>
    %cst_27 = arith.constant dense<0.000000e+00> : vector<16x128xf32>
    %23 = tpu.matmul %21, %22, %cst_27 {dimension_numbers = #tpu.dot_dimension_numbers<[1], [0], [0], [1], [0, 0, 1, 1], [], []>} : vector<16x384xf32>, vector<384x128xf32>, vector<16x128xf32> -> vector<16x128xf32>
    %c0_28 = arith.constant 0 : index
    %c0_29 = arith.constant 0 : index
    %24 = vector.load %arg5[%c0_28, %c0_29] : memref<1x128xf32, #tpu.memory_space<vmem>>, vector<1x128xf32>
    %25 = vector.broadcast %24 : vector<1x128xf32> to vector<16x128xf32>
    %26 = arith.addf %23, %25 : vector<16x128xf32>
    %c0_30 = arith.constant 0 : index
    %c0_31 = arith.constant 0 : index
    %c0_32 = arith.constant 0 : index
    %27 = vector.load %arg1[%c0_30, %c0_31, %c0_32] : memref<1x16x128xf32, #tpu.memory_space<vmem>>, vector<1x16x128xf32>
    %28 = vector.shape_cast %27 : vector<1x16x128xf32> to vector<16x128xf32>
    %29 = arith.addf %26, %28 : vector<16x128xf32>
    %cst_33 = arith.constant 0.000000e+00 : f32
    %30 = vector.broadcast %cst_33 : f32 to vector<16x128xf32>
    %31 = arith.maximumf %29, %30 : vector<16x128xf32>
    %c0_34 = arith.constant 0 : index
    %c0_35 = arith.constant 0 : index
    %c0_36 = arith.constant 0 : index
    %32 = vector.load %arg6[%c0_34, %c0_35, %c0_36] : memref<1x16x128xf32, #tpu.memory_space<vmem>>, vector<1x16x128xf32>
    %33 = vector.shape_cast %32 : vector<1x16x128xf32> to vector<16x128xf32>
    %34 = vector.shape_cast %31 : vector<16x128xf32> to vector<1x16x128xf32>
    tpu.vector_store %arg6[%c0_34, %c0_35, %c0_36], %34 {strides = array<i32>} : memref<1x16x128xf32, #tpu.memory_space<vmem>>, vector<1x16x128xf32>,
    return
  }
  func.func @transform_0(%arg0: i32) -> (i32, i32, i32) {
    %c0_i32 = arith.constant 0 : i32
    %c0_i32_0 = arith.constant 0 : i32
    %c0_i32_1 = arith.constant 0 : i32
    return %arg0, %c0_i32, %c0_i32_0 : i32, i32, i32
  }
  func.func @transform_1(%arg0: i32) -> (i32, i32) {
    %c0_i32 = arith.constant 0 : i32
    %c0_i32_0 = arith.constant 0 : i32
    %c0_i32_1 = arith.constant 0 : i32
    return %c0_i32, %c0_i32_0 : i32, i32
  }
  func.func @transform_2(%arg0: i32) -> (i32, i32) {
    %c0_i32 = arith.constant 0 : i32
    %c0_i32_0 = arith.constant 0 : i32
    %c0_i32_1 = arith.constant 0 : i32
    return %c0_i32, %c0_i32_0 : i32, i32
  }
  func.func @transform_3(%arg0: i32) -> (i32, i32) {
    %c0_i32 = arith.constant 0 : i32
    %c0_i32_0 = arith.constant 0 : i32
    %c0_i32_1 = arith.constant 0 : i32
    return %c0_i32, %c0_i32_0 : i32, i32
  }
  func.func @transform_4(%arg0: i32) -> (i32, i32) {
    %c0_i32 = arith.constant 0 : i32
    %c0_i32_0 = arith.constant 0 : i32
    %c0_i32_1 = arith.constant 0 : i32
    return %c0_i32, %c0_i32_0 : i32, i32
  }
  func.func @transform_5(%arg0: i32) -> (i32, i32, i32) {
    %c0_i32 = arith.constant 0 : i32
    %c0_i32_0 = arith.constant 0 : i32
    %c0_i32_1 = arith.constant 0 : i32
    return %arg0, %c0_i32, %c0_i32_0 : i32, i32, i32
  }
}

</mosaic_0001>

<llo_original>
// kernel: tpu_custom_call.1
$region0: #{tpu_custom_call.1}
  #allocation0 [shape = 'u32[]', space=smem, size = 0x4, offset = 0x4, fixed_abs, tag = 'smem constant byte address 0x4 - core index']
  #allocation1 [shape = 'u32[72,128]{1,0:T(1,128)}', space=vmem, size = 0x9000, scoped, tag = 'internal scratch']
  #allocation2 [shape = 'f32[18,128]{1,0:T(8,128)}', space=vmem, size = 0x3000, scoped, tag = 'scratch operand']
  %s0 = inlined_call_operand.hbm [shape: f32[1,16,128], index: 0, kind: input, shape index: {}]
  %s1 = inlined_call_operand.hbm [shape: f32[384,128], index: 1, kind: input, shape index: {}]
  %s2 = inlined_call_operand.hbm [shape: f32[384,128], index: 2, kind: input, shape index: {}]
  %s3 = inlined_call_operand.vmem [shape: f32[1,128], index: 3, kind: input, shape index: {}]
  %s4 = inlined_call_operand.vmem [shape: f32[1,128], index: 4, kind: input, shape index: {}]
  %s5 = inlined_call_operand.hbm [shape: f32[1,16,128], index: 5, kind: output, shape index: {}]
  %s6 = sld [smem:[#allocation0]]
  $region42: #{tpu_custom_call.1} parent=0
    _
  %s8 = ssub.s32 1, %s6
  %s9 = scalar_select 0, %s8, %s6
  $region1: #{tpu_custom_call.1} parent=0
    #allocation3 [shape = 'u8[8192]{0}', space=vmem, size = 0x2000, scoped, tag = 'input window, operand 0, single buffered']
    #allocation4 [shape = 's32[1]{0}', space=sflag, size = 0x4, scoped, tag = 'scoped memory for tpu_custom_call.1']
    #allocation5 [shape = 's32[1]{0}', space=sflag, size = 0x4, scoped, tag = 'scoped memory for tpu_custom_call.1']
    #allocation6 [shape = 'u8[196608]{0}', space=vmem, size = 0x30000, scoped, tag = 'input window, operand 1, single buffered']
    #allocation7 [shape = 's32[1]{0}', space=sflag, size = 0x4, scoped, tag = 'scoped memory for tpu_custom_call.1']
    #allocation8 [shape = 'u8[196608]{0}', space=vmem, size = 0x30000, scoped, tag = 'input window, operand 2, single buffered']
    #allocation9 [shape = 'u8[8192]{0}', space=vmem, size = 0x2000, scoped, tag = 'output window, operand 0, single buffered']
    %10 = vsyncpa [#allocation4], 0
    %11 = vsyncpa [#allocation7], 0
    %12 = vsyncpa [#allocation5], 0
    // Predicated region
    $region2: #{tpu_custom_call.1} parent=1 // pred_check
      _
    $region3: #{tpu_custom_call.1} parent=1 // pred_check_branch
      %14 = sbr.rel (0) target = $region5
    $region4: #{tpu_custom_call.1} parent=1 // pred_region
      %16 = vsyncadd [#allocation4], 0
      %s17 = sshll.u32 %s0, 4
      %s18 = int_to_ptr.hbm [resolvable:$true] %s17
      %s19 = sshll.u32 [#allocation3], 4
      %s20 = int_to_ptr.vmem [resolvable:$true] %s19
      %25 = dma.hbm_to_vmem [thread:$0]  %s18, 256, %s20, [#allocation4], 128, 128, 8
    $region5: #{tpu_custom_call.1} parent=1 // pred_fallthru
      _
    // Predicated region
    $region6: #{tpu_custom_call.1} parent=1 // pred_check
      _
    $region7: #{tpu_custom_call.1} parent=1 // pred_check_branch
      %27 = sbr.rel (0) target = $region9
    $region8: #{tpu_custom_call.1} parent=1 // pred_region
      %29 = vsyncadd [#allocation7], 0
      %s30 = sshll.u32 %s1, 4
      %s31 = int_to_ptr.hbm [resolvable:$true] %s30
      %s32 = sshll.u32 [#allocation6], 4
      %s33 = int_to_ptr.vmem [resolvable:$true] %s32
      %38 = dma.hbm_to_vmem [thread:$0]  %s31, 6144, %s33, [#allocation7], 128, 128, 8
    $region9: #{tpu_custom_call.1} parent=1 // pred_fallthru
      _
    // Predicated region
    $region10: #{tpu_custom_call.1} parent=1 // pred_check
      _
    $region11: #{tpu_custom_call.1} parent=1 // pred_check_branch
      %40 = sbr.rel (0) target = $region13
    $region12: #{tpu_custom_call.1} parent=1 // pred_region
      %42 = vsyncadd [#allocation7], 0
      %s43 = sshll.u32 %s2, 4
      %s44 = int_to_ptr.hbm [resolvable:$true] %s43
      %s45 = sshll.u32 [#allocation8], 4
      %s46 = int_to_ptr.vmem [resolvable:$true] %s45
      %51 = dma.hbm_to_vmem [thread:$0]  %s44, 6144, %s46, [#allocation7], 128, 128, 8
    $region13: #{tpu_custom_call.1} parent=1 // pred_fallthru
      _
    // Predicated region
    $region14: #{tpu_custom_call.1} parent=1 // pred_check
      _
    $region15: #{tpu_custom_call.1} parent=1 // pred_check_branch
      %53 = sbr.rel (0) target = $region17
    $region16: #{tpu_custom_call.1} parent=1 // pred_region
      _
    $region17: #{tpu_custom_call.1} parent=1 // pred_fallthru
      _
    // Predicated region
    $region18: #{tpu_custom_call.1} parent=1 // pred_check
      _
    $region19: #{tpu_custom_call.1} parent=1 // pred_check_branch
      %55 = sbr.rel (0) target = $region21
    $region20: #{tpu_custom_call.1} parent=1 // pred_region
      _
    $region21: #{tpu_custom_call.1} parent=1 // pred_fallthru
      _
    // Predicated region
    $region22: #{tpu_custom_call.1} parent=1 // pred_check
      _
    $region23: #{tpu_custom_call.1} parent=1 // pred_check_branch
      %57 = sbr.rel (0) target = $region25
    $region24: #{tpu_custom_call.1} parent=1 // pred_region
      %59 = dma.done [#allocation4], 256
    $region25: #{tpu_custom_call.1} parent=1 // pred_fallthru
      _
    // Predicated region
    $region26: #{tpu_custom_call.1} parent=1 // pred_check
      _
    $region27: #{tpu_custom_call.1} parent=1 // pred_check_branch
      %61 = sbr.rel (0) target = $region29
    $region28: #{tpu_custom_call.1} parent=1 // pred_region
      %63 = dma.done [#allocation7], 6144
    $region29: #{tpu_custom_call.1} parent=1 // pred_fallthru
      _
    // Predicated region
    $region30: #{tpu_custom_call.1} parent=1 // pred_check
      _
    $region31: #{tpu_custom_call.1} parent=1 // pred_check_branch
      %65 = sbr.rel (0) target = $region33
    $region32: #{tpu_custom_call.1} parent=1 // pred_region
      %67 = dma.done [#allocation7], 6144
    $region33: #{tpu_custom_call.1} parent=1 // pred_fallthru
      _
    %68 = vst [vmem:[#allocation2] sm:$0x1] 0.0
    %v69 = vld [vmem:[#allocation3] sm:$0xff]
    %v70 = vld [vmem:[#allocation3 + $0x8] sm:$0xff]
    %71 = vst [vmem:[#allocation2 + $0x1] sm:$0xff] %v69
    %72 = vst [vmem:[#allocation2 + $0x9] sm:$0xff] %v70
    %73 = vst [vmem:[#allocation2 + $0x11] sm:$0x1] 0.0
    %v74 = vld [vmem:[#allocation2] sm:$0xff]
    %v75 = vld [vmem:[#allocation2 + $0x8] sm:$0xff]
    %v76 = vld [vmem:[#allocation2 + $0x1] sm:$0xff]
    %v77 = vld [vmem:[#allocation2 + $0x9] sm:$0xff]
    %v78 = vld [vmem:[#allocation2 + $0x2] sm:$0xff]
    %v79 = vld [vmem:[#allocation2 + $0xa] sm:$0xff]
    %v80 = vld [vmem:[#allocation6] sm:$0xff]
    %v81 = vld [vmem:[#allocation6 + $0x8] sm:$0xff]
    %v82 = vld [vmem:[#allocation6 + $0x10] sm:$0xff]
    %v83 = vld [vmem:[#allocation6 + $0x18] sm:$0xff]
    %v84 = vld [vmem:[#allocation6 + $0x20] sm:$0xff]
    %v85 = vld [vmem:[#allocation6 + $0x28] sm:$0xff]
    %v86 = vld [vmem:[#allocation6 + $0x30] sm:$0xff]
    %v87 = vld [vmem:[#allocation6 + $0x38] sm:$0xff]
    %v88 = vld [vmem:[#allocation6 + $0x40] sm:$0xff]
    %v89 = vld [vmem:[#allocation6 + $0x48] sm:$0xff]
    %v90 = vld [vmem:[#allocation6 + $0x50] sm:$0xff]
    %v91 = vld [vmem:[#allocation6 + $0x58] sm:$0xff]
    %v92 = vld [vmem:[#allocation6 + $0x60] sm:$0xff]
    %v93 = vld [vmem:[#allocation6 + $0x68] sm:$0xff]
    %v94 = vld [vmem:[#allocation6 + $0x70] sm:$0xff]
    %v95 = vld [vmem:[#allocation6 + $0x78] sm:$0xff]
    %v96 = vld [vmem:[#allocation6 + $0x80] sm:$0xff]
    %v97 = vld [vmem:[#allocation6 + $0x88] sm:$0xff]
    %v98 = vld [vmem:[#allocation6 + $0x90] sm:$0xff]
    %v99 = vld [vmem:[#allocation6 + $0x98] sm:$0xff]
    %v100 = vld [vmem:[#allocation6 + $0xa0] sm:$0xff]
    %v101 = vld [vmem:[#allocation6 + $0xa8] sm:$0xff]
    %v102 = vld [vmem:[#allocation6 + $0xb0] sm:$0xff]
    %v103 = vld [vmem:[#allocation6 + $0xb8] sm:$0xff]
    %v104 = vld [vmem:[#allocation6 + $0xc0] sm:$0xff]
    %v105 = vld [vmem:[#allocation6 + $0xc8] sm:$0xff]
    %v106 = vld [vmem:[#allocation6 + $0xd0] sm:$0xff]
    %v107 = vld [vmem:[#allocation6 + $0xd8] sm:$0xff]
    %v108 = vld [vmem:[#allocation6 + $0xe0] sm:$0xff]
    %v109 = vld [vmem:[#allocation6 + $0xe8] sm:$0xff]
    %v110 = vld [vmem:[#allocation6 + $0xf0] sm:$0xff]
    %v111 = vld [vmem:[#allocation6 + $0xf8] sm:$0xff]
    %v112 = vld [vmem:[#allocation6 + $0x100] sm:$0xff]
    %v113 = vld [vmem:[#allocation6 + $0x108] sm:$0xff]
    %v114 = vld [vmem:[#allocation6 + $0x110] sm:$0xff]
    %v115 = vld [vmem:[#allocation6 + $0x118] sm:$0xff]
    %v116 = vld [vmem:[#allocation6 + $0x120] sm:$0xff]
    %v117 = vld [vmem:[#allocation6 + $0x128] sm:$0xff]
    %v118 = vld [vmem:[#allocation6 + $0x130] sm:$0xff]
    %v119 = vld [vmem:[#allocation6 + $0x138] sm:$0xff]
    %v120 = vld [vmem:[#allocation6 + $0x140] sm:$0xff]
    %v121 = vld [vmem:[#allocation6 + $0x148] sm:$0xff]
    %v122 = vld [vmem:[#allocation6 + $0x150] sm:$0xff]
    %v123 = vld [vmem:[#allocation6 + $0x158] sm:$0xff]
    %v124 = vld [vmem:[#allocation6 + $0x160] sm:$0xff]
    %v125 = vld [vmem:[#allocation6 + $0x168] sm:$0xff]
    %v126 = vld [vmem:[#allocation6 + $0x170] sm:$0xff]
    %v127 = vld [vmem:[#allocation6 + $0x178] sm:$0xff]
    %v128 = vld [vmem:[%s3] sm:$0x1]
    %v130 = vperm.slane %v128, 0
    %132 = vmatpush.msra.mxu0 %v95
    %133 = vmatpush.msra.mxu0 %v94
    %134 = vmatpush.msra.mxu0 %v93
    %135 = vmatpush.msra.mxu0 %v92
    %136 = vmatpush.msra.mxu0 %v91
    %137 = vmatpush.msra.mxu0 %v90
    %138 = vmatpush.msra.mxu0 %v89
    %139 = vmatpush.msra.mxu0 %v88
    %140 = vmatpush.msra.mxu0 %v87
    %141 = vmatpush.msra.mxu0 %v86
    %142 = vmatpush.msra.mxu0 %v85
    %143 = vmatpush.msra.mxu0 %v84
    %144 = vmatpush.msra.mxu0 %v83
    %145 = vmatpush.msra.mxu0 %v82
    %146 = vmatpush.msra.mxu0 %v81
    %147 = vmatpush.msra.mxu0 %v80
    %148 = vmatmul.f32.gmra.mxu0 %v74
    %v149 = vpop.f32.mrf.mxu0
    %v150 = vadd.f32 %v130, %v149
    %151 = vmatmul.f32.gmra.mxu0 %v75
    %v152 = vpop.f32.mrf.mxu0
    %v153 = vadd.f32 %v130, %v152
    %154 = vdwg.mxu0
    %155 = vmatpush.msra.mxu0 %v111
    %156 = vmatpush.msra.mxu0 %v110
    %157 = vmatpush.msra.mxu0 %v109
    %158 = vmatpush.msra.mxu0 %v108
    %159 = vmatpush.msra.mxu0 %v107
    %160 = vmatpush.msra.mxu0 %v106
    %161 = vmatpush.msra.mxu0 %v105
    %162 = vmatpush.msra.mxu0 %v104
    %163 = vmatpush.msra.mxu0 %v103
    %164 = vmatpush.msra.mxu0 %v102
    %165 = vmatpush.msra.mxu0 %v101
    %166 = vmatpush.msra.mxu0 %v100
    %167 = vmatpush.msra.mxu0 %v99
    %168 = vmatpush.msra.mxu0 %v98
    %169 = vmatpush.msra.mxu0 %v97
    %170 = vmatpush.msra.mxu0 %v96
    %171 = vmatmul.f32.gmra.mxu0 %v76
    %v172 = vpop.f32.mrf.mxu0
    %v173 = vadd.f32 %v150, %v172
    %174 = vmatmul.f32.gmra.mxu0 %v77
    %v175 = vpop.f32.mrf.mxu0
    %v176 = vadd.f32 %v153, %v175
    %177 = vdwg.mxu0
    %178 = vmatpush.msra.mxu0 %v127
    %179 = vmatpush.msra.mxu0 %v126
    %180 = vmatpush.msra.mxu0 %v125
    %181 = vmatpush.msra.mxu0 %v124
    %182 = vmatpush.msra.mxu0 %v123
    %183 = vmatpush.msra.mxu0 %v122
    %184 = vmatpush.msra.mxu0 %v121
    %185 = vmatpush.msra.mxu0 %v120
    %186 = vmatpush.msra.mxu0 %v119
    %187 = vmatpush.msra.mxu0 %v118
    %188 = vmatpush.msra.mxu0 %v117
    %189 = vmatpush.msra.mxu0 %v116
    %190 = vmatpush.msra.mxu0 %v115
    %191 = vmatpush.msra.mxu0 %v114
    %192 = vmatpush.msra.mxu0 %v113
    %193 = vmatpush.msra.mxu0 %v112
    %194 = vmatmul.f32.gmra.mxu0 %v78
    %v195 = vpop.f32.mrf.mxu0
    %v196 = vadd.f32 %v173, %v195
    %197 = vmatmul.f32.gmra.mxu0 %v79
    %v198 = vpop.f32.mrf.mxu0
    %v199 = vadd.f32 %v176, %v198
    %200 = vdwg.mxu0
    %v201 = vmax.f32 %v196, 0.0
    %v202 = vmax.f32 %v199, 0.0
    %203 = vst [vmem:[#allocation2 + $0x1] sm:$0xff] %v201
    %204 = vst [vmem:[#allocation2 + $0x9] sm:$0xff] %v202
    %v205 = vld [vmem:[#allocation2] sm:$0xff]
    %v206 = vld [vmem:[#allocation2 + $0x8] sm:$0xff]
    %v207 = vld [vmem:[#allocation2 + $0x1] sm:$0xff]
    %v208 = vld [vmem:[#allocation2 + $0x9] sm:$0xff]
    %v209 = vld [vmem:[#allocation2 + $0x2] sm:$0xff]
    %v210 = vld [vmem:[#allocation2 + $0xa] sm:$0xff]
    %v211 = vld [vmem:[#allocation8] sm:$0xff]
    %v212 = vld [vmem:[#allocation8 + $0x8] sm:$0xff]
    %v213 = vld [vmem:[#allocation8 + $0x10] sm:$0xff]
    %v214 = vld [vmem:[#allocation8 + $0x18] sm:$0xff]
    %v215 = vld [vmem:[#allocation8 + $0x20] sm:$0xff]
    %v216 = vld [vmem:[#allocation8 + $0x28] sm:$0xff]
    %v217 = vld [vmem:[#allocation8 + $0x30] sm:$0xff]
    %v218 = vld [vmem:[#allocation8 + $0x38] sm:$0xff]
    %v219 = vld [vmem:[#allocation8 + $0x40] sm:$0xff]
    %v220 = vld [vmem:[#allocation8 + $0x48] sm:$0xff]
    %v221 = vld [vmem:[#allocation8 + $0x50] sm:$0xff]
    %v222 = vld [vmem:[#allocation8 + $0x58] sm:$0xff]
    %v223 = vld [vmem:[#allocation8 + $0x60] sm:$0xff]
    %v224 = vld [vmem:[#allocation8 + $0x68] sm:$0xff]
    %v225 = vld [vmem:[#allocation8 + $0x70] sm:$0xff]
    %v226 = vld [vmem:[#allocation8 + $0x78] sm:$0xff]
    %v227 = vld [vmem:[#allocation8 + $0x80] sm:$0xff]
    %v228 = vld [vmem:[#allocation8 + $0x88] sm:$0xff]
    %v229 = vld [vmem:[#allocation8 + $0x90] sm:$0xff]
    %v230 = vld [vmem:[#allocation8 + $0x98] sm:$0xff]
    %v231 = vld [vmem:[#allocation8 + $0xa0] sm:$0xff]
    %v232 = vld [vmem:[#allocation8 + $0xa8] sm:$0xff]
    %v233 = vld [vmem:[#allocation8 + $0xb0] sm:$0xff]
    %v234 = vld [vmem:[#allocation8 + $0xb8] sm:$0xff]
    %v235 = vld [vmem:[#allocation8 + $0xc0] sm:$0xff]
    %v236 = vld [vmem:[#allocation8 + $0xc8] sm:$0xff]
    %v237 = vld [vmem:[#allocation8 + $0xd0] sm:$0xff]
    %v238 = vld [vmem:[#allocation8 + $0xd8] sm:$0xff]
    %v239 = vld [vmem:[#allocation8 + $0xe0] sm:$0xff]
    %v240 = vld [vmem:[#allocation8 + $0xe8] sm:$0xff]
    %v241 = vld [vmem:[#allocation8 + $0xf0] sm:$0xff]
    %v242 = vld [vmem:[#allocation8 + $0xf8] sm:$0xff]
    %v243 = vld [vmem:[#allocation8 + $0x100] sm:$0xff]
    %v244 = vld [vmem:[#allocation8 + $0x108] sm:$0xff]
    %v245 = vld [vmem:[#allocation8 + $0x110] sm:$0xff]
    %v246 = vld [vmem:[#allocation8 + $0x118] sm:$0xff]
    %v247 = vld [vmem:[#allocation8 + $0x120] sm:$0xff]
    %v248 = vld [vmem:[#allocation8 + $0x128] sm:$0xff]
    %v249 = vld [vmem:[#allocation8 + $0x130] sm:$0xff]
    %v250 = vld [vmem:[#allocation8 + $0x138] sm:$0xff]
    %v251 = vld [vmem:[#allocation8 + $0x140] sm:$0xff]
    %v252 = vld [vmem:[#allocation8 + $0x148] sm:$0xff]
    %v253 = vld [vmem:[#allocation8 + $0x150] sm:$0xff]
    %v254 = vld [vmem:[#allocation8 + $0x158] sm:$0xff]
    %v255 = vld [vmem:[#allocation8 + $0x160] sm:$0xff]
    %v256 = vld [vmem:[#allocation8 + $0x168] sm:$0xff]
    %v257 = vld [vmem:[#allocation8 + $0x170] sm:$0xff]
    %v258 = vld [vmem:[#allocation8 + $0x178] sm:$0xff]
    %v259 = vld [vmem:[%s4] sm:$0x1]
    %v261 = vperm.slane %v259, 0
    %263 = vmatpush.msra.mxu0 %v226
    %264 = vmatpush.msra.mxu0 %v225
    %265 = vmatpush.msra.mxu0 %v224
    %266 = vmatpush.msra.mxu0 %v223
    %267 = vmatpush.msra.mxu0 %v222
    %268 = vmatpush.msra.mxu0 %v221
    %269 = vmatpush.msra.mxu0 %v220
    %270 = vmatpush.msra.mxu0 %v219
    %271 = vmatpush.msra.mxu0 %v218
    %272 = vmatpush.msra.mxu0 %v217
    %273 = vmatpush.msra.mxu0 %v216
    %274 = vmatpush.msra.mxu0 %v215
    %275 = vmatpush.msra.mxu0 %v214
    %276 = vmatpush.msra.mxu0 %v213
    %277 = vmatpush.msra.mxu0 %v212
    %278 = vmatpush.msra.mxu0 %v211
    %279 = vmatmul.f32.gmra.mxu0 %v205
    %v280 = vpop.f32.mrf.mxu0
    %v281 = vadd.f32 %v261, %v280
    %282 = vmatmul.f32.gmra.mxu0 %v206
    %v283 = vpop.f32.mrf.mxu0
    %v284 = vadd.f32 %v261, %v283
    %285 = vdwg.mxu0
    %286 = vmatpush.msra.mxu0 %v242
    %287 = vmatpush.msra.mxu0 %v241
    %288 = vmatpush.msra.mxu0 %v240
    %289 = vmatpush.msra.mxu0 %v239
    %290 = vmatpush.msra.mxu0 %v238
    %291 = vmatpush.msra.mxu0 %v237
    %292 = vmatpush.msra.mxu0 %v236
    %293 = vmatpush.msra.mxu0 %v235
    %294 = vmatpush.msra.mxu0 %v234
    %295 = vmatpush.msra.mxu0 %v233
    %296 = vmatpush.msra.mxu0 %v232
    %297 = vmatpush.msra.mxu0 %v231
    %298 = vmatpush.msra.mxu0 %v230
    %299 = vmatpush.msra.mxu0 %v229
    %300 = vmatpush.msra.mxu0 %v228
    %301 = vmatpush.msra.mxu0 %v227
    %302 = vmatmul.f32.gmra.mxu0 %v207
    %v303 = vpop.f32.mrf.mxu0
    %v304 = vadd.f32 %v281, %v303
    %305 = vmatmul.f32.gmra.mxu0 %v208
    %v306 = vpop.f32.mrf.mxu0
    %v307 = vadd.f32 %v284, %v306
    %308 = vdwg.mxu0
    %309 = vmatpush.msra.mxu0 %v258
    %310 = vmatpush.msra.mxu0 %v257
    %311 = vmatpush.msra.mxu0 %v256
    %312 = vmatpush.msra.mxu0 %v255
    %313 = vmatpush.msra.mxu0 %v254
    %314 = vmatpush.msra.mxu0 %v253
    %315 = vmatpush.msra.mxu0 %v252
    %316 = vmatpush.msra.mxu0 %v251
    %317 = vmatpush.msra.mxu0 %v250
    %318 = vmatpush.msra.mxu0 %v249
    %319 = vmatpush.msra.mxu0 %v248
    %320 = vmatpush.msra.mxu0 %v247
    %321 = vmatpush.msra.mxu0 %v246
    %322 = vmatpush.msra.mxu0 %v245
    %323 = vmatpush.msra.mxu0 %v244
    %324 = vmatpush.msra.mxu0 %v243
    %325 = vmatmul.f32.gmra.mxu0 %v209
    %v326 = vpop.f32.mrf.mxu0
    %v327 = vadd.f32 %v304, %v326
    %328 = vmatmul.f32.gmra.mxu0 %v210
    %v329 = vpop.f32.mrf.mxu0
    %v330 = vadd.f32 %v307, %v329
    %331 = vdwg.mxu0
    %v332 = vld [vmem:[#allocation3] sm:$0xff]
    %v333 = vld [vmem:[#allocation3 + $0x8] sm:$0xff]
    %v334 = vadd.f32 %v327, %v332
    %v335 = vadd.f32 %v330, %v333
    %v336 = vmax.f32 %v334, 0.0
    %v337 = vmax.f32 %v335, 0.0
    %338 = vst [vmem:[#allocation9] sm:$0xff] %v336
    %339 = vst [vmem:[#allocation9 + $0x8] sm:$0xff] %v337
    // Predicated region
    $region34: #{tpu_custom_call.1} parent=1 // pred_check
      _
    $region35: #{tpu_custom_call.1} parent=1 // pred_check_branch
      %341 = sbr.rel (0) target = $region37
    $region36: #{tpu_custom_call.1} parent=1 // pred_region
      %343 = vsyncadd [#allocation5], 0
      %s344 = sshll.u32 [#allocation9], 4
      %s345 = int_to_ptr.vmem [resolvable:$true] %s344
      %s346 = sshll.u32 %s5, 4
      %s347 = int_to_ptr.hbm [resolvable:$true] %s346
      %352 = dma.vmem_to_hbm [thread:$0]  %s345, 256, %s347, [#allocation5], 128, 128, 8
    $region37: #{tpu_custom_call.1} parent=1 // pred_fallthru
      _
    // Predicated region
    $region38: #{tpu_custom_call.1} parent=1 // pred_check
      _
    $region39: #{tpu_custom_call.1} parent=1 // pred_check_branch
      %354 = sbr.rel (0) target = $region41
    $region40: #{tpu_custom_call.1} parent=1 // pred_region
      %356 = dma.done [#allocation5], 256
    $region41: #{tpu_custom_call.1} parent=1 // pred_fallthru
      _
    %357 = vsyncpa [#allocation4], 1
    %358 = vsyncpa [#allocation7], 1
    %359 = vsyncpa [#allocation5], 1

</llo_original>
